<compile_context>
chip_gen: v6e
topology: v6e:2x2x1
jax: 0.10.0
libtpu: 0.0.40
codegen_flags: <defaults>
</compile_context>

<pallas_src>
import jax
import jax.numpy as jnp
from jax.experimental import pallas as pl
from jax.experimental.pallas import tpu as pltpu

# Layer dims of the wrapped NestedWrappedModule MLP.
DIMS = [8, 4, 16, 16, 4, 8]
IN_DIM = DIMS[0]
OUT_DIM = DIMS[-1]


# --------------------------------------------------------------------------- #
# One-time parameter preparation (NOT on the per-forward path).
# --------------------------------------------------------------------------- #
def prepare_fused_params(params):
    """Collapse the affine chain [(W_i, b_i)] into one packed (in+1, out) array.

        y = (...((x@W1 + b1)@W2 + b2)...)@W5 + b5  ==  x @ W_fused + b_fused

    Returned array is [W_fused ; b_fused] stacked on axis 0, so the kernel
    needs only two inputs (x, w_aug).  Params keep their dtype (no forced f32
    upcast); call this once at module-init time and cache the result.
    """
    w_f, b_f = params[0]
    for w_i, b_i in params[1:]:
        w_f = w_f @ w_i
        b_f = b_f @ w_i + b_i
    return jnp.concatenate([w_f, b_f], axis=0)  # (in_dim + 1, out_dim)


# --------------------------------------------------------------------------- #
# Kernel: one MXU matmul + bias row add, entirely in VMEM.
# --------------------------------------------------------------------------- #
def _fused_affine_kernel(x_ref, w_aug_ref, o_ref):
    x = x_ref[...]                                   # (tile_b, in_dim), native dtype
    w = w_aug_ref[0:IN_DIM, :]                       # (in_dim, out_dim)
    b = w_aug_ref[IN_DIM:IN_DIM + 1, :]              # (1, out_dim)
    y = jnp.dot(x, w, preferred_element_type=jnp.float32)  # f32 accumulate on MXU
    y = y + b.astype(jnp.float32)
    o_ref[...] = y.astype(o_ref.dtype)


def _choose_batch_tile(batch):
    """Full-array block for small batches; 8-row-aligned tiles for large ones.

    Tiles are sized to stay far below v7x's 64 MiB VMEM (32 MiB default scoped)
    even with double-buffering, while still being big enough to amortize the
    ~0.35 us per-grid-step overhead.
    """
    if batch <= 1024:
        return batch
    for t in (2048, 1024, 512, 256, 128, 64, 32, 16, 8):
        if batch % t == 0:
            return t
    return batch  # irregular batch: single block


# --------------------------------------------------------------------------- #
# Per-forward path: exactly one dispatch (a single pallas_call).
# --------------------------------------------------------------------------- #
def module_with_delay_forward(x, w_aug):
    """x: (batch, IN_DIM); w_aug: (IN_DIM+1, OUT_DIM) from prepare_fused_params."""
    batch = x.shape[0]
    tile_b = _choose_batch_tile(batch)
    grid = (batch // tile_b,)

    return pl.pallas_call(
        _fused_affine_kernel,
        out_shape=jax.ShapeDtypeStruct((batch, OUT_DIM), x.dtype),
        grid=grid,
        in_specs=[
            pl.BlockSpec((tile_b, IN_DIM), lambda i: (i, 0)),
            pl.BlockSpec((IN_DIM + 1, OUT_DIM), lambda i: (0, 0)),
        ],
        out_specs=pl.BlockSpec((tile_b, OUT_DIM), lambda i: (i, 0)),
        compiler_params=pltpu.CompilerParams(
            dimension_semantics=("parallel",),  # shards rows across TCs on v7x
        ),
    )(x, w_aug)


# --------------------------------------------------------------------------- #
# Deterministic init + unfused reference.
# --------------------------------------------------------------------------- #
def init_params(key):
    """Uniform init with PyTorch-Linear-like bounds; W: (in, out), b: (1, out)."""
    params = []
    for i in range(len(DIMS) - 1):
        fan_in, fan_out = DIMS[i], DIMS[i + 1]
        key, kw, kb = jax.random.split(key, 3)
        bound = 1.0 / (fan_in ** 0.5)
        w = jax.random.uniform(kw, (fan_in, fan_out), jnp.float32, -bound, bound)
        b = jax.random.uniform(kb, (1, fan_out), jnp.float32, -bound, bound)
        params.append((w, b))
    return params


def reference_forward(x, params):
    """Unfused layer-by-layer reference (matches the PyTorch module exactly)."""
    h = x.astype(jnp.float32)
    for w, b in params:
        h = h @ w + b
    return h


if __name__ == "__main__":
    key = jax.random.PRNGKey(0)
    key, kx = jax.random.split(key)

    batch = 4  # NestedWrappedModule.get_input returns torch.rand(4, 8)
    x = jax.random.uniform(kx, (batch, DIMS[0]), jnp.float32)
    params = init_params(key)

    # One-time fusion / packing (module-init time, cached — not per forward).
    w_aug = jax.block_until_ready(prepare_fused_params(params))

    out = module_with_delay_forward(x, w_aug)
    out = jax.block_until_ready(out)

    ref = reference_forward(x, params)
    assert out.shape == (batch, DIMS[-1])
    # Fusion re-associates f32 arithmetic; well within tolerance at these dims.
    assert jnp.allclose(out, ref, atol=1e-5, rtol=1e-5), "mismatch vs reference"

    print("KERNEL_OK")
</pallas_src>

<mosaic_0001>
module attributes {stable_mosaic.version = 11 : i64} {
  func.func @_fused_affine_kernel(%arg0: i32, %arg1: memref<4x8xf32, #tpu.memory_space<vmem>>, %arg2: memref<9x8xf32, #tpu.memory_space<vmem>>, %arg3: memref<4x8xf32, #tpu.memory_space<vmem>>) attributes {dimension_semantics = [#tpu.dimension_semantics<parallel>], iteration_bounds = array<i64: 1>, scalar_prefetch = 0 : i64, scratch_operands = 0 : i64, tpu.core_type = #tpu.core_type<tc>, window_params = [{transform_indices = @transform_0, window_bounds = array<i64: 4, 8>}, {pipeline_mode = #tpu.pipeline_mode<synchronous>, transform_indices = @transform_1, window_bounds = array<i64: 9, 8>}, {transform_indices = @transform_2, window_bounds = array<i64: 4, 8>}]} {
    %c0 = arith.constant 0 : index
    %c0_0 = arith.constant 0 : index
    %0 = vector.load %arg1[%c0, %c0_0] : memref<4x8xf32, #tpu.memory_space<vmem>>, vector<4x8xf32>
    %c0_1 = arith.constant 0 : index
    %c0_2 = arith.constant 0 : index
    %1 = vector.load %arg2[%c0_1, %c0_2] : memref<9x8xf32, #tpu.memory_space<vmem>>, vector<8x8xf32>
    %c8 = arith.constant 8 : index
    %c0_3 = arith.constant 0 : index
    %2 = vector.load %arg2[%c8, %c0_3] : memref<9x8xf32, #tpu.memory_space<vmem>>, vector<1x8xf32>
    %cst = arith.constant dense<0.000000e+00> : vector<4x8xf32>
    %3 = tpu.matmul %0, %1, %cst {dimension_numbers = #tpu.dot_dimension_numbers<[1], [0], [0], [1], [0, 0, 1, 1], [], []>} : vector<4x8xf32>, vector<8x8xf32>, vector<4x8xf32> -> vector<4x8xf32>
    %4 = vector.broadcast %2 : vector<1x8xf32> to vector<4x8xf32>
    %5 = arith.addf %3, %4 : vector<4x8xf32>
    %c0_4 = arith.constant 0 : index
    %c0_5 = arith.constant 0 : index
    %6 = vector.load %arg3[%c0_4, %c0_5] : memref<4x8xf32, #tpu.memory_space<vmem>>, vector<4x8xf32>
    tpu.vector_store %arg3[%c0_4, %c0_5], %5 {strides = array<i32>} : memref<4x8xf32, #tpu.memory_space<vmem>>, vector<4x8xf32>,
    return
  }
  func.func @transform_0(%arg0: i32) -> (i32, i32) {
    %c0_i32 = arith.constant 0 : i32
    %c0_i32_0 = arith.constant 0 : i32
    return %arg0, %c0_i32 : i32, i32
  }
  func.func @transform_1(%arg0: i32) -> (i32, i32) {
    %c0_i32 = arith.constant 0 : i32
    %c0_i32_0 = arith.constant 0 : i32
    %c0_i32_1 = arith.constant 0 : i32
    return %c0_i32, %c0_i32_0 : i32, i32
  }
  func.func @transform_2(%arg0: i32) -> (i32, i32) {
    %c0_i32 = arith.constant 0 : i32
    %c0_i32_0 = arith.constant 0 : i32
    return %arg0, %c0_i32 : i32, i32
  }
}

</mosaic_0001>

<llo_original>
// kernel: tpu_custom_call.1
$region0: #{tpu_custom_call.1}
  #allocation0 [shape = 'u32[]', space=smem, size = 0x4, offset = 0x4, fixed_abs, tag = 'smem constant byte address 0x4 - core index']
  #allocation1 [shape = 'u32[144,128]{1,0:T(1,128)}', space=vmem, size = 0x12000, scoped, tag = 'internal scratch']
  %s0 = inlined_call_operand.vmem [shape: f32[4,8], index: 0, kind: input, shape index: {}]
  %s1 = inlined_call_operand.vmem [shape: f32[9,8], index: 1, kind: input, shape index: {}]
  %s2 = inlined_call_operand.hbm [shape: f32[4,8], index: 2, kind: output, shape index: {}]
  %s3 = sld [smem:[#allocation0]]
  $region18: #{tpu_custom_call.1} parent=0
    _
  %s5 = ssub.s32 1, %s3
  %s6 = scalar_select 0, %s5, %s3
  $region1: #{tpu_custom_call.1} parent=0
    #allocation2 [shape = 'u8[2048]{0}', space=vmem, size = 0x800, scoped, tag = 'output window, operand 0, single buffered']
    #allocation3 [shape = 's32[1]{0}', space=sflag, size = 0x4, scoped, tag = 'scoped memory for tpu_custom_call.1']
    %7 = vsyncpa [#allocation3], 0
    // Predicated region
    $region2: #{tpu_custom_call.1} parent=1 // pred_check
      _
    $region3: #{tpu_custom_call.1} parent=1 // pred_check_branch
      %9 = sbr.rel (0) target = $region5
    $region4: #{tpu_custom_call.1} parent=1 // pred_region
      _
    $region5: #{tpu_custom_call.1} parent=1 // pred_fallthru
      _
    // Predicated region
    $region6: #{tpu_custom_call.1} parent=1 // pred_check
      _
    $region7: #{tpu_custom_call.1} parent=1 // pred_check_branch
      %11 = sbr.rel (0) target = $region9
    $region8: #{tpu_custom_call.1} parent=1 // pred_region
      _
    $region9: #{tpu_custom_call.1} parent=1 // pred_fallthru
      _
    %v12 = vld [vmem:[%s0] sm:$0xf]
    %v13 = vld [vmem:[%s1] sm:$0xff]
    %v14 = vld [vmem:[%s1 + $0x8] sm:$0x1]
    %v15 = vlaneseq
    %v16 = vshrl.u32 %v15, 7
    %v17 = vsub.s32 0, %v16
    %v18 = vrot.slane %v14, %v17
    %vm19 = vcmask 64512
    %v21 = vsel %vm19, %v12, 0
    %23 = vmatprep.subr.mxu0 0.0
    %24 = vmatpush1.msra.mxu0 0.0
    %25 = vmatprep.subr.mxu0 0.0
    %26 = vmatpush1.msra.mxu0 0.0
    %27 = vmatprep.subr.mxu0 0.0
    %28 = vmatpush1.msra.mxu0 0.0
    %29 = vmatprep.subr.mxu0 0.0
    %30 = vmatpush1.msra.mxu0 0.0
    %31 = vmatprep.subr.mxu0 0.0
    %32 = vmatpush1.msra.mxu0 0.0
    %33 = vmatprep.subr.mxu0 0.0
    %34 = vmatpush1.msra.mxu0 0.0
    %35 = vmatprep.subr.mxu0 0.0
    %36 = vmatpush1.msra.mxu0 0.0
    %37 = vmatprep.subr.mxu0 0.0
    %38 = vmatpush1.msra.mxu0 0.0
    %39 = vmatprep.subr.mxu0 0.0
    %40 = vmatpush1.msra.mxu0 0.0
    %41 = vmatprep.subr.mxu0 0.0
    %42 = vmatpush1.msra.mxu0 0.0
    %43 = vmatprep.subr.mxu0 0.0
    %44 = vmatpush1.msra.mxu0 0.0
    %45 = vmatprep.subr.mxu0 0.0
    %46 = vmatpush1.msra.mxu0 0.0
    %47 = vmatprep.subr.mxu0 0.0
    %48 = vmatpush1.msra.mxu0 0.0
    %49 = vmatprep.subr.mxu0 0.0
    %50 = vmatpush1.msra.mxu0 0.0
    %51 = vmatprep.subr.mxu0 0.0
    %52 = vmatpush1.msra.mxu0 0.0
    %53 = vmatprep.subr.mxu0 0.0
    %54 = vmatpush1.msra.mxu0 %v13
    %55 = vmatprep.subr.mxu0 0.0
    %56 = vmatpush2.msra.mxu0 0.0
    %57 = vmatprep.subr.mxu0 0.0
    %58 = vmatpush2.msra.mxu0 0.0
    %59 = vmatprep.subr.mxu0 0.0
    %60 = vmatpush2.msra.mxu0 0.0
    %61 = vmatprep.subr.mxu0 0.0
    %62 = vmatpush2.msra.mxu0 0.0
    %63 = vmatprep.subr.mxu0 0.0
    %64 = vmatpush2.msra.mxu0 0.0
    %65 = vmatprep.subr.mxu0 0.0
    %66 = vmatpush2.msra.mxu0 0.0
    %67 = vmatprep.subr.mxu0 0.0
    %68 = vmatpush2.msra.mxu0 0.0
    %69 = vmatprep.subr.mxu0 0.0
    %70 = vmatpush2.msra.mxu0 0.0
    %71 = vmatprep.subr.mxu0 0.0
    %72 = vmatpush2.msra.mxu0 0.0
    %73 = vmatprep.subr.mxu0 0.0
    %74 = vmatpush2.msra.mxu0 0.0
    %75 = vmatprep.subr.mxu0 0.0
    %76 = vmatpush2.msra.mxu0 0.0
    %77 = vmatprep.subr.mxu0 0.0
    %78 = vmatpush2.msra.mxu0 0.0
    %79 = vmatprep.subr.mxu0 0.0
    %80 = vmatpush2.msra.mxu0 0.0
    %81 = vmatprep.subr.mxu0 0.0
    %82 = vmatpush2.msra.mxu0 0.0
    %83 = vmatprep.subr.mxu0 0.0
    %84 = vmatpush2.msra.mxu0 0.0
    %85 = vmatprep.subr.mxu0 0.0
    %86 = vmatpush2.msra.mxu0 0.0
    %87 = vmatprep.mubr.f32.mxu0 0.0
    %88 = vmatmul.mubr.f32.gmra.mxu0 %v21
    %v89 = vpop.f32.mrf.mxu0
    %v90 = vadd.f32 %v18, %v89
    %v91 = vpop.f32.mrf.mxu0
    %92 = vdwg.mxu0
    %vm93 = vcmask 60416
    %94 = vst.msk [vmem:[#allocation2] sm:$0xf] %vm93, %v90
    // Predicated region
    $region10: #{tpu_custom_call.1} parent=1 // pred_check
      _
    $region11: #{tpu_custom_call.1} parent=1 // pred_check_branch
      %96 = sbr.rel (0) target = $region13
    $region12: #{tpu_custom_call.1} parent=1 // pred_region
      %s98 = ssub.s32 64, 64
      %99 = vsyncadd [#allocation3], %s98
      %s101 = sshll.u32 [#allocation2], 4
      %s102 = int_to_ptr.vmem [resolvable:$true] %s101
      %104 = dma.vmem_to_hbm [thread:$0]  %s102, 64, %s2, [#allocation3]
    $region13: #{tpu_custom_call.1} parent=1 // pred_fallthru
      _
    // Predicated region
    $region14: #{tpu_custom_call.1} parent=1 // pred_check
      _
    $region15: #{tpu_custom_call.1} parent=1 // pred_check_branch
      %106 = sbr.rel (0) target = $region17
    $region16: #{tpu_custom_call.1} parent=1 // pred_region
      %107 = dma.done [#allocation3], 64
    $region17: #{tpu_custom_call.1} parent=1 // pred_fallthru
      _
    %108 = vsyncpa [#allocation3], 1

</llo_original>
